<compile_context>
chip_gen: v5e
topology: v5e:2x2
jax: 0.10.0
libtpu: 0.0.40
codegen_flags: <defaults>
</compile_context>

<pallas_src>
import jax
import jax.numpy as jnp
import numpy as np
from jax.experimental import pallas as pl
from jax.experimental.pallas import tpu as pltpu

INPUT_SIZE = 163
HIDDEN_SIZE = 256
OUTPUT_SIZE = 7
K_PAD = 256            # padded contraction dim for fc1 (163 -> 256)
OUT_PAD = 128          # lane-dense padded logits width (>= OUTPUT_SIZE)
SUBLANES = 8           # broadcast batch=1 row to a full sublane tile
BN_EPS = 1e-5          # torch.nn.BatchNorm1d default eps
NEG_INF = -1e30        # padded-lane logit bias (exp -> exact 0)


# ----------------------------------------------------------------------------- kernel
def emonet_kernel(x_ref, w_ref, b_ref, out_ref):
    # x_ref: (8, 256) f32   -- input row broadcast to 8 sublanes, K zero-padded
    # w_ref: (256, 384) bf16 -- [ W1' (256x256) | W2' (256x128) ]  (BN-folded)
    # b_ref: (1, 384)  f32  -- [ b1' (256)      | b2' (128, pad=-1e30) ]
    x = x_ref[...].astype(jnp.bfloat16)

    w1 = w_ref[:, :HIDDEN_SIZE]           # (256, 256) bf16
    w2 = w_ref[:, HIDDEN_SIZE:]           # (256, 128) bf16
    b1 = b_ref[:, :HIDDEN_SIZE]           # (1, 256) f32
    b2 = b_ref[:, HIDDEN_SIZE:]           # (1, 128) f32

    # fc1 (bn1 folded in) + tanh
    h = jnp.dot(x, w1, preferred_element_type=jnp.float32) + b1          # (8, 256) f32
    h = jnp.tanh(h)

    # fc2 (bn2 folded in)
    logits = jnp.dot(h.astype(jnp.bfloat16), w2,
                     preferred_element_type=jnp.float32) + b2            # (8, 128) f32

    # softmax over the feature axis (matches F.softmax on (1, 7))
    logits = logits - jnp.max(logits, axis=-1, keepdims=True)
    e = jnp.exp(logits)
    inv = pl.reciprocal(jnp.sum(e, axis=-1, keepdims=True), approx=True)
    out_ref[...] = e * inv


# ----------------------------------------------------------------------------- params
def make_params(key):
    """Deterministic synthetic parameters with EmoNet.__init__ shapes (torch layout,
    weights stored transposed as (in, out) for convenience)."""
    ks = jax.random.split(key, 12)
    f32 = jnp.float32
    return {
        # BatchNorm1d(163)
        "g1": jax.random.normal(ks[0], (INPUT_SIZE,), f32) * 0.1 + 1.0,
        "b1": jax.random.normal(ks[1], (INPUT_SIZE,), f32) * 0.1,
        "m1": jax.random.normal(ks[2], (INPUT_SIZE,), f32) * 0.1,
        "v1": jax.random.uniform(ks[3], (INPUT_SIZE,), f32, 0.5, 1.5),
        # Linear(163, 256)
        "w1": jax.random.normal(ks[4], (INPUT_SIZE, HIDDEN_SIZE), f32) * 0.05,
        "fb1": jax.random.normal(ks[5], (HIDDEN_SIZE,), f32) * 0.05,
        # BatchNorm1d(256)
        "g2": jax.random.normal(ks[6], (HIDDEN_SIZE,), f32) * 0.1 + 1.0,
        "b2": jax.random.normal(ks[7], (HIDDEN_SIZE,), f32) * 0.1,
        "m2": jax.random.normal(ks[8], (HIDDEN_SIZE,), f32) * 0.1,
        "v2": jax.random.uniform(ks[9], (HIDDEN_SIZE,), f32, 0.6, 1.4),
        # Linear(256, 7)
        "w2": jax.random.normal(ks[10], (HIDDEN_SIZE, OUTPUT_SIZE), f32) * 0.05,
        "fb2": jax.random.normal(ks[11], (OUTPUT_SIZE,), f32) * 0.05,
    }


def fold_params(p):
    """Fold eval-mode BatchNorms into the Linear layers, pad, and pack into the two
    arrays the kernel consumes (done once, offline)."""
    f32 = jnp.float32

    # bn1 folded into fc1:  bn1(x) = x*s1 + (b1 - m1*s1)
    s1 = p["g1"] * jax.lax.rsqrt(p["v1"] + BN_EPS)                       # (163,)
    w1f = s1[:, None] * p["w1"]                                          # (163, 256)
    b1f = (p["b1"] - p["m1"] * s1) @ p["w1"] + p["fb1"]                  # (256,)

    # bn2 folded into fc2
    s2 = p["g2"] * jax.lax.rsqrt(p["v2"] + BN_EPS)                       # (256,)
    w2f = s2[:, None] * p["w2"]                                          # (256, 7)
    b2f = (p["b2"] - p["m2"] * s2) @ p["w2"] + p["fb2"]                  # (7,)

    # pad: K 163->256 (zero rows), N2 7->128 (zero cols, bias -1e30)
    w1p = jnp.zeros((K_PAD, HIDDEN_SIZE), f32).at[:INPUT_SIZE, :].set(w1f)
    w2p = jnp.zeros((HIDDEN_SIZE, OUT_PAD), f32).at[:, :OUTPUT_SIZE].set(w2f)
    b2p = jnp.full((OUT_PAD,), NEG_INF, f32).at[:OUTPUT_SIZE].set(b2f)

    w_packed = jnp.concatenate([w1p, w2p], axis=1).astype(jnp.bfloat16)  # (256, 384) bf16
    b_packed = jnp.concatenate([b1f, b2p]).reshape(1, HIDDEN_SIZE + OUT_PAD)  # (1, 384) f32
    return {"w": w_packed, "b": b_packed}


# ----------------------------------------------------------------------------- wrapper
def emonet_forward(x, folded):
    """x: (163,) float vector -> (7,) softmax probabilities (matches EmoNet.forward)."""
    xp = jnp.zeros((K_PAD,), jnp.float32).at[:INPUT_SIZE].set(x.astype(jnp.float32))
    x2 = jnp.broadcast_to(xp[None, :], (SUBLANES, K_PAD))                # unsqueeze + sublane bcast

    vmem = pl.BlockSpec(memory_space=pltpu.MemorySpace.VMEM)
    out = pl.pallas_call(
        emonet_kernel,
        out_shape=jax.ShapeDtypeStruct((SUBLANES, OUT_PAD), jnp.float32),
        in_specs=[vmem, vmem, vmem],
        out_specs=vmem,
    )(x2, folded["w"], folded["b"])
    return out[0, :OUTPUT_SIZE]                                          # squeeze(0) + drop padding
    # TODO(synk): torch.cuda.empty_cache() / .numpy() host transfer / checkpoint
    # loading are runtime glue with no kernel equivalent.


def emonet_reference(x, p):
    """Pure-JAX f32 reference of the original PyTorch forward (eval-mode BatchNorm)."""
    h = x.astype(jnp.float32).reshape(1, INPUT_SIZE)
    h = (h - p["m1"]) / jnp.sqrt(p["v1"] + BN_EPS) * p["g1"] + p["b1"]
    h = jnp.tanh(h @ p["w1"] + p["fb1"])
    h = (h - p["m2"]) / jnp.sqrt(p["v2"] + BN_EPS) * p["g2"] + p["b2"]
    logits = h @ p["w2"] + p["fb2"]
    return jax.nn.softmax(logits, axis=-1)[0]


# ----------------------------------------------------------------------------- main
if __name__ == "__main__":
    key = jax.random.PRNGKey(0)
    k_x, k_p = jax.random.split(key)
    x = jax.random.normal(k_x, (INPUT_SIZE,), jnp.float32)

    params = make_params(k_p)
    folded = fold_params(params)

    out = jax.block_until_ready(emonet_forward(x, folded))
    ref = jax.block_until_ready(emonet_reference(x, params))

    assert out.shape == (OUTPUT_SIZE,)
    # Tolerance loosened vs. pure-f32 reference because kernel weights/activations
    # ride the MXU in bf16 and the softmax uses the approx EUP reciprocal.
    assert np.allclose(np.asarray(out), np.asarray(ref), atol=1e-2, rtol=5e-2), (out, ref)
    assert np.isclose(float(np.sum(np.asarray(out))), 1.0, atol=1e-2)

    print("KERNEL_OK")
</pallas_src>

<mosaic_0001>
module attributes {stable_mosaic.version = 11 : i64} {
  func.func @emonet_kernel(%arg0: memref<8x256xf32, #tpu.memory_space<vmem>>, %arg1: memref<256x384xbf16, #tpu.memory_space<vmem>>, %arg2: memref<1x384xf32, #tpu.memory_space<vmem>>, %arg3: memref<8x128xf32, #tpu.memory_space<vmem>>) attributes {dimension_semantics = [], scalar_prefetch = 0 : i64, scratch_operands = 0 : i64, tpu.core_type = #tpu.core_type<tc>} {
    %c0 = arith.constant 0 : index
    %c0_0 = arith.constant 0 : index
    %0 = vector.load %arg0[%c0, %c0_0] : memref<8x256xf32, #tpu.memory_space<vmem>>, vector<8x256xf32>
    %1 = arith.truncf %0 : vector<8x256xf32> to vector<8x256xbf16>
    %c0_1 = arith.constant 0 : index
    %c0_2 = arith.constant 0 : index
    %2 = vector.load %arg1[%c0_1, %c0_2] : memref<256x384xbf16, #tpu.memory_space<vmem>>, vector<256x256xbf16>
    %c0_3 = arith.constant 0 : index
    %c256 = arith.constant 256 : index
    %3 = vector.load %arg1[%c0_3, %c256] : memref<256x384xbf16, #tpu.memory_space<vmem>>, vector<256x128xbf16>
    %c0_4 = arith.constant 0 : index
    %c0_5 = arith.constant 0 : index
    %4 = vector.load %arg2[%c0_4, %c0_5] : memref<1x384xf32, #tpu.memory_space<vmem>>, vector<1x256xf32>
    %c0_6 = arith.constant 0 : index
    %c256_7 = arith.constant 256 : index
    %5 = vector.load %arg2[%c0_6, %c256_7] : memref<1x384xf32, #tpu.memory_space<vmem>>, vector<1x128xf32>
    %cst = arith.constant dense<0.000000e+00> : vector<8x256xf32>
    %6 = tpu.matmul %1, %2, %cst {dimension_numbers = #tpu.dot_dimension_numbers<[1], [0], [0], [1], [0, 0, 1, 1], [], []>} : vector<8x256xbf16>, vector<256x256xbf16>, vector<8x256xf32> -> vector<8x256xf32>
    %7 = vector.broadcast %4 : vector<1x256xf32> to vector<8x256xf32>
    %8 = arith.addf %6, %7 : vector<8x256xf32>
    %9 = math.tanh %8 : vector<8x256xf32>
    %10 = arith.truncf %9 : vector<8x256xf32> to vector<8x256xbf16>
    %cst_8 = arith.constant dense<0.000000e+00> : vector<8x128xf32>
    %11 = tpu.matmul %10, %3, %cst_8 {dimension_numbers = #tpu.dot_dimension_numbers<[1], [0], [0], [1], [0, 0, 1, 1], [], []>} : vector<8x256xbf16>, vector<256x128xbf16>, vector<8x128xf32> -> vector<8x128xf32>
    %12 = vector.broadcast %5 : vector<1x128xf32> to vector<8x128xf32>
    %13 = arith.addf %11, %12 : vector<8x128xf32>
    %cst_9 = arith.constant dense<0xFF800000> : vector<8xf32>
    %14 = vector.multi_reduction <maximumf>, %13, %cst_9 [1] : vector<8x128xf32> to vector<8xf32>
    %15 = vector.shape_cast %14 : vector<8xf32> to vector<8x1xf32>
    %16 = vector.broadcast %15 : vector<8x1xf32> to vector<8x128xf32>
    %17 = arith.subf %13, %16 : vector<8x128xf32>
    %18 = math.exp %17 : vector<8x128xf32>
    %cst_10 = arith.constant dense<0.000000e+00> : vector<8xf32>
    %19 = vector.multi_reduction <add>, %18, %cst_10 [1] : vector<8x128xf32> to vector<8xf32>
    %20 = vector.shape_cast %19 : vector<8xf32> to vector<8x1xf32>
    %21 = tpu.reciprocal %20 {approx = true} : vector<8x1xf32> -> vector<8x1xf32>
    %22 = vector.broadcast %21 : vector<8x1xf32> to vector<8x128xf32>
    %23 = arith.mulf %18, %22 : vector<8x128xf32>
    %c0_11 = arith.constant 0 : index
    %c0_12 = arith.constant 0 : index
    %24 = vector.load %arg3[%c0_11, %c0_12] : memref<8x128xf32, #tpu.memory_space<vmem>>, vector<8x128xf32>
    tpu.vector_store %arg3[%c0_11, %c0_12], %23 {strides = array<i32>} : memref<8x128xf32, #tpu.memory_space<vmem>>, vector<8x128xf32>,
    return
  }
}

</mosaic_0001>

<llo_original>
// kernel: tpu_custom_call.1
$region0: #{tpu_custom_call.1}
  #allocation0 [shape = 'u32[]', space=smem, size = 0x4, offset = 0x4, fixed_abs, tag = 'smem constant byte address 0x4 - core index']
  #allocation1 [shape = 'u32[72,128]{1,0:T(1,128)}', space=vmem, size = 0x9000, scoped, tag = 'internal scratch']
  %s0 = inlined_call_operand.hbm [shape: f32[8,256], index: 0, kind: input, shape index: {}]
  %s1 = inlined_call_operand.hbm [shape: bf16[256,384], index: 1, kind: input, shape index: {}]
  %s2 = inlined_call_operand.hbm [shape: f32[1,384], index: 2, kind: input, shape index: {}]
  %s3 = inlined_call_operand.hbm [shape: f32[8,128], index: 3, kind: output, shape index: {}]
  %s4 = sld [smem:[#allocation0]]
  $region34: #{tpu_custom_call.1} parent=0
    _
  %s6 = ssub.s32 1, %s4
  %s7 = scalar_select 0, %s6, %s4
  $region1: #{tpu_custom_call.1} parent=0
    #allocation2 [shape = 'u8[8192]{0}', space=vmem, size = 0x2000, scoped, tag = 'input window, operand 0, single buffered']
    #allocation3 [shape = 's32[1]{0}', space=sflag, size = 0x4, scoped, tag = 'scoped memory for tpu_custom_call.1']
    #allocation4 [shape = 's32[1]{0}', space=sflag, size = 0x4, scoped, tag = 'scoped memory for tpu_custom_call.1']
    #allocation5 [shape = 'u8[196608]{0}', space=vmem, size = 0x30000, scoped, tag = 'input window, operand 1, single buffered']
    #allocation6 [shape = 's32[1]{0}', space=sflag, size = 0x4, scoped, tag = 'scoped memory for tpu_custom_call.1']
    #allocation7 [shape = 'u8[1536]{0}', space=vmem, size = 0x800, scoped, tag = 'input window, operand 2, single buffered']
    #allocation8 [shape = 'u8[4096]{0}', space=vmem, size = 0x1000, scoped, tag = 'output window, operand 0, single buffered']
    %8 = vsyncpa [#allocation3], 0
    %9 = vsyncpa [#allocation6], 0
    %10 = vsyncpa [#allocation4], 0
    // Predicated region
    $region2: #{tpu_custom_call.1} parent=1 // pred_check
      _
    $region3: #{tpu_custom_call.1} parent=1 // pred_check_branch
      %12 = sbr.rel (0) target = $region5
    $region4: #{tpu_custom_call.1} parent=1 // pred_region
      %14 = vsyncadd [#allocation3], 0
      %s16 = sshll.u32 %s0, 4
      %s17 = int_to_ptr.hbm [resolvable:$true] %s16
      %s18 = sshll.u32 [#allocation2], 4
      %s19 = int_to_ptr.vmem [resolvable:$true] %s18
      %21 = dma.hbm_to_vmem [thread:$0]  %s17, 256, %s19, [#allocation3]
    $region5: #{tpu_custom_call.1} parent=1 // pred_fallthru
      _
    // Predicated region
    $region6: #{tpu_custom_call.1} parent=1 // pred_check
      _
    $region7: #{tpu_custom_call.1} parent=1 // pred_check_branch
      %23 = sbr.rel (0) target = $region9
    $region8: #{tpu_custom_call.1} parent=1 // pred_region
      %25 = vsyncadd [#allocation6], 0
      %s26 = sshll.u32 %s1, 4
      %s27 = int_to_ptr.hbm [resolvable:$true] %s26
      %s28 = sshll.u32 [#allocation5], 4
      %s29 = int_to_ptr.vmem [resolvable:$true] %s28
      %34 = dma.hbm_to_vmem [thread:$0]  %s27, 6144, %s29, [#allocation6], 192, 192, 12
    $region9: #{tpu_custom_call.1} parent=1 // pred_fallthru
      _
    // Predicated region
    $region10: #{tpu_custom_call.1} parent=1 // pred_check
      _
    $region11: #{tpu_custom_call.1} parent=1 // pred_check_branch
      %36 = sbr.rel (0) target = $region13
    $region12: #{tpu_custom_call.1} parent=1 // pred_region
      %38 = vsyncadd [#allocation6], 0
      %s40 = sshll.u32 %s2, 4
      %s41 = int_to_ptr.hbm [resolvable:$true] %s40
      %s42 = sshll.u32 [#allocation7], 4
      %s43 = int_to_ptr.vmem [resolvable:$true] %s42
      %45 = dma.hbm_to_vmem [thread:$0]  %s41, 48, %s43, [#allocation6]
    $region13: #{tpu_custom_call.1} parent=1 // pred_fallthru
      _
    // Predicated region
    $region14: #{tpu_custom_call.1} parent=1 // pred_check
      _
    $region15: #{tpu_custom_call.1} parent=1 // pred_check_branch
      %47 = sbr.rel (0) target = $region17
    $region16: #{tpu_custom_call.1} parent=1 // pred_region
      %49 = dma.done [#allocation3], 256
    $region17: #{tpu_custom_call.1} parent=1 // pred_fallthru
      _
    // Predicated region
    $region18: #{tpu_custom_call.1} parent=1 // pred_check
      _
    $region19: #{tpu_custom_call.1} parent=1 // pred_check_branch
      %51 = sbr.rel (0) target = $region21
    $region20: #{tpu_custom_call.1} parent=1 // pred_region
      %53 = dma.done [#allocation6], 6144
    $region21: #{tpu_custom_call.1} parent=1 // pred_fallthru
      _
    // Predicated region
    $region22: #{tpu_custom_call.1} parent=1 // pred_check
      _
    $region23: #{tpu_custom_call.1} parent=1 // pred_check_branch
      %55 = sbr.rel (0) target = $region25
    $region24: #{tpu_custom_call.1} parent=1 // pred_region
      %57 = dma.done [#allocation6], 48
    $region25: #{tpu_custom_call.1} parent=1 // pred_fallthru
      _
    %v58 = vld [vmem:[#allocation2] sm:$0xff]
    %v59 = vld [vmem:[#allocation2 + $0x8] sm:$0xff]
    %v60 = vpack.c.bf16 %v58, %v58
    %v61 = vpack.c.bf16 %v59, %v59
    %v62 = vld [vmem:[#allocation5] sm:$0xff]
    %v63 = vld [vmem:[#allocation5 + $0xc] sm:$0xff]
    %v64 = vld [vmem:[#allocation5 + $0x18] sm:$0xff]
    %v65 = vld [vmem:[#allocation5 + $0x24] sm:$0xff]
    %v66 = vld [vmem:[#allocation5 + $0x30] sm:$0xff]
    %v67 = vld [vmem:[#allocation5 + $0x3c] sm:$0xff]
    %v68 = vld [vmem:[#allocation5 + $0x48] sm:$0xff]
    %v69 = vld [vmem:[#allocation5 + $0x54] sm:$0xff]
    %v70 = vld [vmem:[#allocation5 + $0x60] sm:$0xff]
    %v71 = vld [vmem:[#allocation5 + $0x6c] sm:$0xff]
    %v72 = vld [vmem:[#allocation5 + $0x78] sm:$0xff]
    %v73 = vld [vmem:[#allocation5 + $0x84] sm:$0xff]
    %v74 = vld [vmem:[#allocation5 + $0x90] sm:$0xff]
    %v75 = vld [vmem:[#allocation5 + $0x9c] sm:$0xff]
    %v76 = vld [vmem:[#allocation5 + $0xa8] sm:$0xff]
    %v77 = vld [vmem:[#allocation5 + $0xb4] sm:$0xff]
    %v78 = vld [vmem:[#allocation5 + $0xc0] sm:$0xff]
    %v79 = vld [vmem:[#allocation5 + $0xcc] sm:$0xff]
    %v80 = vld [vmem:[#allocation5 + $0xd8] sm:$0xff]
    %v81 = vld [vmem:[#allocation5 + $0xe4] sm:$0xff]
    %v82 = vld [vmem:[#allocation5 + $0xf0] sm:$0xff]
    %v83 = vld [vmem:[#allocation5 + $0xfc] sm:$0xff]
    %v84 = vld [vmem:[#allocation5 + $0x108] sm:$0xff]
    %v85 = vld [vmem:[#allocation5 + $0x114] sm:$0xff]
    %v86 = vld [vmem:[#allocation5 + $0x120] sm:$0xff]
    %v87 = vld [vmem:[#allocation5 + $0x12c] sm:$0xff]
    %v88 = vld [vmem:[#allocation5 + $0x138] sm:$0xff]
    %v89 = vld [vmem:[#allocation5 + $0x144] sm:$0xff]
    %v90 = vld [vmem:[#allocation5 + $0x150] sm:$0xff]
    %v91 = vld [vmem:[#allocation5 + $0x15c] sm:$0xff]
    %v92 = vld [vmem:[#allocation5 + $0x168] sm:$0xff]
    %v93 = vld [vmem:[#allocation5 + $0x174] sm:$0xff]
    %v94 = vld [vmem:[#allocation5 + $0x8] sm:$0xf]
    %v95 = vld [vmem:[#allocation5 + $0x14] sm:$0xf]
    %v96 = vld [vmem:[#allocation5 + $0x20] sm:$0xf]
    %v97 = vld [vmem:[#allocation5 + $0x2c] sm:$0xf]
    %v98 = vld [vmem:[#allocation5 + $0x38] sm:$0xf]
    %v99 = vld [vmem:[#allocation5 + $0x44] sm:$0xf]
    %v100 = vld [vmem:[#allocation5 + $0x50] sm:$0xf]
    %v101 = vld [vmem:[#allocation5 + $0x5c] sm:$0xf]
    %v102 = vld [vmem:[#allocation5 + $0x68] sm:$0xf]
    %v103 = vld [vmem:[#allocation5 + $0x74] sm:$0xf]
    %v104 = vld [vmem:[#allocation5 + $0x80] sm:$0xf]
    %v105 = vld [vmem:[#allocation5 + $0x8c] sm:$0xf]
    %v106 = vld [vmem:[#allocation5 + $0x98] sm:$0xf]
    %v107 = vld [vmem:[#allocation5 + $0xa4] sm:$0xf]
    %v108 = vld [vmem:[#allocation5 + $0xb0] sm:$0xf]
    %v109 = vld [vmem:[#allocation5 + $0xbc] sm:$0xf]
    %v110 = vld [vmem:[#allocation5 + $0xc8] sm:$0xf]
    %v111 = vld [vmem:[#allocation5 + $0xd4] sm:$0xf]
    %v112 = vld [vmem:[#allocation5 + $0xe0] sm:$0xf]
    %v113 = vld [vmem:[#allocation5 + $0xec] sm:$0xf]
    %v114 = vld [vmem:[#allocation5 + $0xf8] sm:$0xf]
    %v115 = vld [vmem:[#allocation5 + $0x104] sm:$0xf]
    %v116 = vld [vmem:[#allocation5 + $0x110] sm:$0xf]
    %v117 = vld [vmem:[#allocation5 + $0x11c] sm:$0xf]
    %v118 = vld [vmem:[#allocation5 + $0x128] sm:$0xf]
    %v119 = vld [vmem:[#allocation5 + $0x134] sm:$0xf]
    %v120 = vld [vmem:[#allocation5 + $0x140] sm:$0xf]
    %v121 = vld [vmem:[#allocation5 + $0x14c] sm:$0xf]
    %v122 = vld [vmem:[#allocation5 + $0x158] sm:$0xf]
    %v123 = vld [vmem:[#allocation5 + $0x164] sm:$0xf]
    %v124 = vld [vmem:[#allocation5 + $0x170] sm:$0xf]
    %v125 = vld [vmem:[#allocation5 + $0x17c] sm:$0xf]
    %v126 = vld [vmem:[#allocation7] sm:$0x3]
    %v127 = vld [vmem:[#allocation7 + $0x2] sm:$0x1]
    %v129 = vperm.slane %v126, 0
    %v130 = vperm.slane %v126, 1
    %v165 = vunpack.c.l.b16 %v62
    %v166 = vunpack.c.h.b16 %v62
    %v167 = vunpack.c.l.b16 %v63
    %v168 = vunpack.c.h.b16 %v63
    %v169 = vunpack.c.l.b16 %v64
    %v170 = vunpack.c.h.b16 %v64
    %v171 = vunpack.c.l.b16 %v65
    %v172 = vunpack.c.h.b16 %v65
    %v173 = vunpack.c.l.b16 %v66
    %v174 = vunpack.c.h.b16 %v66
    %v175 = vunpack.c.l.b16 %v67
    %v176 = vunpack.c.h.b16 %v67
    %v177 = vunpack.c.l.b16 %v68
    %v178 = vunpack.c.h.b16 %v68
    %v179 = vunpack.c.l.b16 %v69
    %v180 = vunpack.c.h.b16 %v69
    %v181 = vunpack.c.l.b16 %v70
    %v182 = vunpack.c.h.b16 %v70
    %v183 = vunpack.c.l.b16 %v71
    %v184 = vunpack.c.h.b16 %v71
    %v185 = vunpack.c.l.b16 %v72
    %v186 = vunpack.c.h.b16 %v72
    %v187 = vunpack.c.l.b16 %v73
    %v188 = vunpack.c.h.b16 %v73
    %v189 = vunpack.c.l.b16 %v74
    %v190 = vunpack.c.h.b16 %v74
    %v191 = vunpack.c.l.b16 %v75
    %v192 = vunpack.c.h.b16 %v75
    %v193 = vunpack.c.l.b16 %v76
    %v194 = vunpack.c.h.b16 %v76
    %v195 = vunpack.c.l.b16 %v77
    %v196 = vunpack.c.h.b16 %v77
    %v197 = vunpack.c.l.b16 %v78
    %v198 = vunpack.c.h.b16 %v78
    %v199 = vunpack.c.l.b16 %v79
    %v200 = vunpack.c.h.b16 %v79
    %v201 = vunpack.c.l.b16 %v80
    %v202 = vunpack.c.h.b16 %v80
    %v203 = vunpack.c.l.b16 %v81
    %v204 = vunpack.c.h.b16 %v81
    %v205 = vunpack.c.l.b16 %v82
    %v206 = vunpack.c.h.b16 %v82
    %v207 = vunpack.c.l.b16 %v83
    %v208 = vunpack.c.h.b16 %v83
    %v209 = vunpack.c.l.b16 %v84
    %v210 = vunpack.c.h.b16 %v84
    %v211 = vunpack.c.l.b16 %v85
    %v212 = vunpack.c.h.b16 %v85
    %v213 = vunpack.c.l.b16 %v86
    %v214 = vunpack.c.h.b16 %v86
    %v215 = vunpack.c.l.b16 %v87
    %v216 = vunpack.c.h.b16 %v87
    %v217 = vunpack.c.l.b16 %v88
    %v218 = vunpack.c.h.b16 %v88
    %v219 = vunpack.c.l.b16 %v89
    %v220 = vunpack.c.h.b16 %v89
    %v221 = vunpack.c.l.b16 %v90
    %v222 = vunpack.c.h.b16 %v90
    %v223 = vunpack.c.l.b16 %v91
    %v224 = vunpack.c.h.b16 %v91
    %v225 = vunpack.c.l.b16 %v92
    %v226 = vunpack.c.h.b16 %v92
    %v227 = vunpack.c.l.b16 %v93
    %v228 = vunpack.c.h.b16 %v93
    %v229 = vpack.c.b16 %v167, %v165
    %v230 = vpack.c.b16 %v168, %v166
    %v231 = vpack.c.b16 %v171, %v169
    %v232 = vpack.c.b16 %v172, %v170
    %v233 = vpack.c.b16 %v175, %v173
    %v234 = vpack.c.b16 %v176, %v174
    %v235 = vpack.c.b16 %v179, %v177
    %v236 = vpack.c.b16 %v180, %v178
    %v237 = vpack.c.b16 %v183, %v181
    %v238 = vpack.c.b16 %v184, %v182
    %v239 = vpack.c.b16 %v187, %v185
    %v240 = vpack.c.b16 %v188, %v186
    %v241 = vpack.c.b16 %v191, %v189
    %v242 = vpack.c.b16 %v192, %v190
    %v243 = vpack.c.b16 %v195, %v193
    %v244 = vpack.c.b16 %v196, %v194
    %v245 = vpack.c.b16 %v199, %v197
    %v246 = vpack.c.b16 %v200, %v198
    %v247 = vpack.c.b16 %v203, %v201
    %v248 = vpack.c.b16 %v204, %v202
    %v249 = vpack.c.b16 %v207, %v205
    %v250 = vpack.c.b16 %v208, %v206
    %v251 = vpack.c.b16 %v211, %v209
    %v252 = vpack.c.b16 %v212, %v210
    %v253 = vpack.c.b16 %v215, %v213
    %v254 = vpack.c.b16 %v216, %v214
    %v255 = vpack.c.b16 %v219, %v217
    %v256 = vpack.c.b16 %v220, %v218
    %v257 = vpack.c.b16 %v223, %v221
    %v258 = vpack.c.b16 %v224, %v222
    %v259 = vpack.c.b16 %v227, %v225
    %v260 = vpack.c.b16 %v228, %v226
    %293 = vmatpush.bf16.msra.mxu0 %v243
    %294 = vmatpush.bf16.msra.mxu0 %v241
    %295 = vmatpush.bf16.msra.mxu0 %v239
    %296 = vmatpush.bf16.msra.mxu0 %v237
    %297 = vmatpush.bf16.msra.mxu0 %v235
    %298 = vmatpush.bf16.msra.mxu0 %v233
    %299 = vmatpush.bf16.msra.mxu0 %v231
    %300 = vmatpush.bf16.msra.mxu0 %v229
    %301 = vmatmul.bf16.gmra.mxu0 %v60
    %v302 = vpop.f32.mrf.mxu0
    %v303 = vadd.f32 %v129, %v302
    %v304 = vpop.f32.mrf.mxu0
    %305 = vdwg.mxu0
    %306 = vmatpush.bf16.msra.mxu0 %v259
    %307 = vmatpush.bf16.msra.mxu0 %v257
    %308 = vmatpush.bf16.msra.mxu0 %v255
    %309 = vmatpush.bf16.msra.mxu0 %v253
    %310 = vmatpush.bf16.msra.mxu0 %v251
    %311 = vmatpush.bf16.msra.mxu0 %v249
    %312 = vmatpush.bf16.msra.mxu0 %v247
    %313 = vmatpush.bf16.msra.mxu0 %v245
    %314 = vmatmul.bf16.gmra.mxu0 %v61
    %v315 = vpop.f32.mrf.mxu0
    %v316 = vadd.f32 %v303, %v315
    %v317 = vpop.f32.mrf.mxu0
    %318 = vdwg.mxu0
    %319 = vmatpush.bf16.msra.mxu0 %v244
    %320 = vmatpush.bf16.msra.mxu0 %v242
    %321 = vmatpush.bf16.msra.mxu0 %v240
    %322 = vmatpush.bf16.msra.mxu0 %v238
    %323 = vmatpush.bf16.msra.mxu0 %v236
    %324 = vmatpush.bf16.msra.mxu0 %v234
    %325 = vmatpush.bf16.msra.mxu0 %v232
    %326 = vmatpush.bf16.msra.mxu0 %v230
    %327 = vmatmul.bf16.gmra.mxu0 %v60
    %v328 = vpop.f32.mrf.mxu0
    %v329 = vadd.f32 %v130, %v328
    %v330 = vpop.f32.mrf.mxu0
    %331 = vdwg.mxu0
    %332 = vmatpush.bf16.msra.mxu0 %v260
    %333 = vmatpush.bf16.msra.mxu0 %v258
    %334 = vmatpush.bf16.msra.mxu0 %v256
    %335 = vmatpush.bf16.msra.mxu0 %v254
    %336 = vmatpush.bf16.msra.mxu0 %v252
    %337 = vmatpush.bf16.msra.mxu0 %v250
    %338 = vmatpush.bf16.msra.mxu0 %v248
    %339 = vmatpush.bf16.msra.mxu0 %v246
    %340 = vmatmul.bf16.gmra.mxu0 %v61
    %v341 = vpop.f32.mrf.mxu0
    %v342 = vadd.f32 %v329, %v341
    %v343 = vpop.f32.mrf.mxu0
    %344 = vdwg.mxu0
    %v345 = vtanh.pop %v316
    %v346 = vtanh.pop %v342
    %v347 = vpack.c.bf16 %v345, %v345
    %v348 = vpack.c.bf16 %v346, %v346
    %v350 = vperm.slane %v127, 0
    %v384 = vunpack.c.l.b16 %v94
    %v385 = vunpack.c.l.b16 %v95
    %v386 = vunpack.c.l.b16 %v96
    %v387 = vunpack.c.l.b16 %v97
    %v388 = vunpack.c.l.b16 %v98
    %v389 = vunpack.c.l.b16 %v99
    %v390 = vunpack.c.l.b16 %v100
    %v391 = vunpack.c.l.b16 %v101
    %v392 = vunpack.c.l.b16 %v102
    %v393 = vunpack.c.l.b16 %v103
    %v394 = vunpack.c.l.b16 %v104
    %v395 = vunpack.c.l.b16 %v105
    %v396 = vunpack.c.l.b16 %v106
    %v397 = vunpack.c.l.b16 %v107
    %v398 = vunpack.c.l.b16 %v108
    %v399 = vunpack.c.l.b16 %v109
    %v400 = vunpack.c.l.b16 %v110
    %v401 = vunpack.c.l.b16 %v111
    %v402 = vunpack.c.l.b16 %v112
    %v403 = vunpack.c.l.b16 %v113
    %v404 = vunpack.c.l.b16 %v114
    %v405 = vunpack.c.l.b16 %v115
    %v406 = vunpack.c.l.b16 %v116
    %v407 = vunpack.c.l.b16 %v117
    %v408 = vunpack.c.l.b16 %v118
    %v409 = vunpack.c.l.b16 %v119
    %v410 = vunpack.c.l.b16 %v120
    %v411 = vunpack.c.l.b16 %v121
    %v412 = vunpack.c.l.b16 %v122
    %v413 = vunpack.c.l.b16 %v123
    %v414 = vunpack.c.l.b16 %v124
    %v415 = vunpack.c.l.b16 %v125
    %v416 = vpack.c.b16 %v385, %v384
    %v417 = vpack.c.b16 %v387, %v386
    %v418 = vpack.c.b16 %v389, %v388
    %v419 = vpack.c.b16 %v391, %v390
    %v420 = vpack.c.b16 %v393, %v392
    %v421 = vpack.c.b16 %v395, %v394
    %v422 = vpack.c.b16 %v397, %v396
    %v423 = vpack.c.b16 %v399, %v398
    %v424 = vpack.c.b16 %v401, %v400
    %v425 = vpack.c.b16 %v403, %v402
    %v426 = vpack.c.b16 %v405, %v404
    %v427 = vpack.c.b16 %v407, %v406
    %v428 = vpack.c.b16 %v409, %v408
    %v429 = vpack.c.b16 %v411, %v410
    %v430 = vpack.c.b16 %v413, %v412
    %v431 = vpack.c.b16 %v415, %v414
    %448 = vmatpush.bf16.msra.mxu0 %v423
    %449 = vmatpush.bf16.msra.mxu0 %v422
    %450 = vmatpush.bf16.msra.mxu0 %v421
    %451 = vmatpush.bf16.msra.mxu0 %v420
    %452 = vmatpush.bf16.msra.mxu0 %v419
    %453 = vmatpush.bf16.msra.mxu0 %v418
    %454 = vmatpush.bf16.msra.mxu0 %v417
    %455 = vmatpush.bf16.msra.mxu0 %v416
    %456 = vmatmul.bf16.gmra.mxu0 %v347
    %v457 = vpop.f32.mrf.mxu0
    %v458 = vadd.f32 %v350, %v457
    %v459 = vpop.f32.mrf.mxu0
    %460 = vdwg.mxu0
    %461 = vmatpush.bf16.msra.mxu0 %v431
    %462 = vmatpush.bf16.msra.mxu0 %v430
    %463 = vmatpush.bf16.msra.mxu0 %v429
    %464 = vmatpush.bf16.msra.mxu0 %v428
    %465 = vmatpush.bf16.msra.mxu0 %v427
    %466 = vmatpush.bf16.msra.mxu0 %v426
    %467 = vmatpush.bf16.msra.mxu0 %v425
    %468 = vmatpush.bf16.msra.mxu0 %v424
    %469 = vmatmul.bf16.gmra.mxu0 %v348
    %v470 = vpop.f32.mrf.mxu0
    %v471 = vadd.f32 %v458, %v470
    %v472 = vpop.f32.mrf.mxu0
    %473 = vdwg.mxu0
    %474 = vmax.xlane.f32.xlu0 %v471
    %v475 = vpop.xlane.xlu0 %474
    %v476 = vsub.f32 %v471, %v475
    %v477 = vmul.f32 %v476, 1.442695
    %v478 = vpow.pop %v477
    %479 = vadd.xlane.f32.xlu0 %v478
    %v480 = vpop.xlane.xlu0 %479
    %v481 = vrcp.pop %v480
    %v482 = vmul.f32 %v478, %v481
    %483 = vst [vmem:[#allocation8] sm:$0xff] %v482
    // Predicated region
    $region26: #{tpu_custom_call.1} parent=1 // pred_check
      _
    $region27: #{tpu_custom_call.1} parent=1 // pred_check_branch
      %485 = sbr.rel (0) target = $region29
    $region28: #{tpu_custom_call.1} parent=1 // pred_region
      %487 = vsyncadd [#allocation4], 0
      %s489 = sshll.u32 [#allocation8], 4
      %s490 = int_to_ptr.vmem [resolvable:$true] %s489
      %s491 = sshll.u32 %s3, 4
      %s492 = int_to_ptr.hbm [resolvable:$true] %s491
      %494 = dma.vmem_to_hbm [thread:$0]  %s490, 128, %s492, [#allocation4]
    $region29: #{tpu_custom_call.1} parent=1 // pred_fallthru
      _
    // Predicated region
    $region30: #{tpu_custom_call.1} parent=1 // pred_check
      _
    $region31: #{tpu_custom_call.1} parent=1 // pred_check_branch
      %496 = sbr.rel (0) target = $region33
    $region32: #{tpu_custom_call.1} parent=1 // pred_region
      %498 = dma.done [#allocation4], 128
    $region33: #{tpu_custom_call.1} parent=1 // pred_fallthru
      _
    %499 = vsyncpa [#allocation3], 1
    %500 = vsyncpa [#allocation6], 1
    %501 = vsyncpa [#allocation4], 1

</llo_original>
